<compile_context>
chip_gen: v6e
topology: v6e:2x2x1
jax: 0.10.0
libtpu: 0.0.40
codegen_flags: <defaults>
</compile_context>

<pallas_src>
import functools

import jax
import jax.numpy as jnp
from jax.experimental import pallas as pl
from jax.experimental.pallas import tpu as pltpu


def _round_up(n: int, m: int) -> int:
    return ((n + m - 1) // m) * m


def _cdiv(a: int, b: int) -> int:
    return -(-a // b)


def resblock_kernel(x_ref, w1_ref, b1_ref, w2_ref, b2_ref, o_ref, acc_ref):
    """One (batch-tile, k-chunk) grid step.

    Per-step shapes:
      x_ref   : (TB, Wp)  f32   -- same block for every k (stays VMEM resident)
      w1_ref  : (Wp, tk)  bf16  -- (in, out) layout, k-th output-column chunk
      b1_ref  : (1,  tk)  f32
      w2_ref  : (tk, Wp)  bf16  -- (in, out) layout, k-th contraction-row chunk
      b2_ref  : (1,  Wp)  f32
      o_ref   : (TB, Wp)  f32   -- revisited across k, written at k == last
      acc_ref : (TB, Wp)  f32 scratch accumulator
    """
    k = pl.program_id(1)

    @pl.when(k == 0)
    def _():
        acc_ref[...] = jnp.zeros_like(acc_ref)

    # activate1 + linear1 (k-th chunk of hidden columns).  Weights are already in
    # (in, out) layout, so the MXU contracts the RHS sublane dim -- no relayout.
    xr = jnp.maximum(x_ref[...], 0.0).astype(w1_ref.dtype)
    h = jnp.dot(xr, w1_ref[...], preferred_element_type=jnp.float32) + b1_ref[...]

    # activate2 + this chunk's partial contribution to linear2.
    h = jnp.maximum(h, 0.0).astype(w2_ref.dtype)
    acc_ref[...] += jnp.dot(h, w2_ref[...], preferred_element_type=jnp.float32)

    @pl.when(k == pl.num_programs(1) - 1)
    def _():
        # bias2 + residual.  x_ref is re-read here (short live range -> no spills
        # across the matmul loops, which matters most on v5e's single vst slot).
        o_ref[...] = (acc_ref[...] + b2_ref[...] + x_ref[...]).astype(o_ref.dtype)


@functools.partial(jax.jit, static_argnames=("batch_tile",))
def resblock_forward(x, w1, b1, w2, b2, *, batch_tile=512):
    """x: (B, W) f32.  w1, w2: (W, W) in PyTorch (out, in) layout.  b1, b2: (W,)."""
    B, W = x.shape
    mxu_dtype = jnp.bfloat16
    w_item = jnp.dtype(mxu_dtype).itemsize

    # ---- Device-aware VMEM budget ------------------------------------------------
    try:
        vmem_cap = int(pltpu.get_tpu_info().vmem_capacity_bytes)
    except Exception:
        vmem_cap = 64 << 20  # conservative fallback: v7x per-TensorCore VMEM
    budget = (vmem_cap * 3) // 4

    # ---- Width / batch-tile heuristics -------------------------------------------
    W128 = _round_up(W, 128)
    eff_bt = int(batch_tile)
    if W128 <= 256:
        # Small widths are DMA/overhead bound: fewer, larger batch steps.
        eff_bt = max(eff_bt, 2048)

    # Balanced batch tiles with minimal padding; >=2 tiles when the batch allows so
    # the "parallel" axis can shard across both v7x TensorCores.
    B8 = _round_up(max(B, 1), 8)
    n_b = max(1, _cdiv(B8, eff_bt))
    if B8 >= 16 and n_b < 2:
        n_b = 2
    TB = _round_up(_cdiv(B8, n_b), 8)
    Bp = n_b * TB

    # Hidden-dim (reduction) tiling: n_k == 1 keeps full weights resident; n_k > 1
    # streams (Wp, tk)/(tk, Wp) weight chunks so the resident footprint fits.
    n_k = 1
    while True:
        tk = _round_up(_cdiv(W128, n_k), 128)
        Wp = n_k * tk
        w_bufs = 1 if n_k == 1 else 2                    # pinned vs streamed chunks
        weight_bytes = w_bufs * 2 * Wp * tk * w_item     # w1 chunk + w2 chunk
        act_bytes = (2 + 2) * TB * Wp * 4 + TB * Wp * 4  # x, out (double-buf) + acc
        est_vmem = weight_bytes + act_bytes + 4 * Wp * 4 + (1 << 20)
        if est_vmem <= budget or tk <= 128:
            break
        n_k += 1

    # ---- Pad inputs / pre-transpose weights to (in, out) --------------------------
    x_p = jnp.pad(x, ((0, Bp - B), (0, Wp - W)))
    w1_p = jnp.pad(w1.T, ((0, Wp - W), (0, Wp - W))).astype(mxu_dtype)
    w2_p = jnp.pad(w2.T, ((0, Wp - W), (0, Wp - W))).astype(mxu_dtype)
    b1_p = jnp.pad(b1, (0, Wp - W)).reshape(1, Wp).astype(jnp.float32)
    b2_p = jnp.pad(b2, (0, Wp - W)).reshape(1, Wp).astype(jnp.float32)

    # Single-buffer the pinned operands (constant index_map) when they are resident
    # and large enough for the VMEM saving to matter.
    single_buf = (n_k == 1) and (Wp >= 512)

    def _pinned_spec(shape, index_map):
        if single_buf:
            return pl.BlockSpec(shape, index_map, pipeline_mode=pl.Buffered(1))
        return pl.BlockSpec(shape, index_map)

    in_specs = [
        pl.BlockSpec((TB, Wp), lambda i, k: (i, 0)),   # x: tiled over batch, k-resident
        _pinned_spec((Wp, tk), lambda i, k: (0, k)),   # w1 (in, out): k-th column chunk
        _pinned_spec((1, tk), lambda i, k: (0, k)),    # b1 chunk
        _pinned_spec((tk, Wp), lambda i, k: (k, 0)),   # w2 (in, out): k-th row chunk
        _pinned_spec((1, Wp), lambda i, k: (0, 0)),    # b2 (always the same block)
    ]

    cp_kwargs = dict(dimension_semantics=("parallel", "arbitrary"))
    # Raise the scoped-VMEM limit when the footprint exceeds the smallest default
    # (16 MiB on v5e), clamped below the physical per-core capacity (64 MiB on v7x).
    if est_vmem > (16 << 20):
        cp_kwargs["vmem_limit_bytes"] = int(
            min(max(est_vmem * 5 // 4, 32 << 20), vmem_cap - (4 << 20)))

    out_p = pl.pallas_call(
        resblock_kernel,
        out_shape=jax.ShapeDtypeStruct((Bp, Wp), x.dtype),
        grid_spec=pltpu.PrefetchScalarGridSpec(
            num_scalar_prefetch=0,
            grid=(n_b, n_k),
            in_specs=in_specs,
            out_specs=pl.BlockSpec((TB, Wp), lambda i, k: (i, 0)),
            scratch_shapes=[pltpu.VMEM((TB, Wp), jnp.float32)],
        ),
        compiler_params=pltpu.CompilerParams(**cp_kwargs),
    )(x_p, w1_p, b1_p, w2_p, b2_p)

    return out_p[:B, :W]


def resblock_reference(x, w1, b1, w2, b2):
    h = jnp.maximum(x, 0.0)
    h = h @ w1.T + b1
    h = jnp.maximum(h, 0.0)
    h = h @ w2.T + b2
    return h + x


if __name__ == "__main__":
    # Small shapes consistent with the module: batch=2, width=32.
    B, W = 2, 32
    key = jax.random.PRNGKey(0)
    kx, kw1, kb1, kw2, kb2 = jax.random.split(key, 5)

    x = jax.random.normal(kx, (B, W), dtype=jnp.float32)
    # Deterministic init mimicking torch.nn.Linear's U(-1/sqrt(W), 1/sqrt(W)).
    bound = 1.0 / (W ** 0.5)
    w1 = jax.random.uniform(kw1, (W, W), jnp.float32, -bound, bound)  # (out, in)
    b1 = jax.random.uniform(kb1, (W,), jnp.float32, -bound, bound)
    w2 = jax.random.uniform(kw2, (W, W), jnp.float32, -bound, bound)
    b2 = jax.random.uniform(kb2, (W,), jnp.float32, -bound, bound)

    out = jax.block_until_ready(resblock_forward(x, w1, b1, w2, b2))

    ref = resblock_reference(x, w1, b1, w2, b2)
    assert out.shape == (B, W) and out.dtype == jnp.float32
    # bf16 MXU operands with f32 accumulation -> loosened tolerance vs f32 reference.
    assert jnp.allclose(out, ref, atol=2e-2, rtol=2e-2), "mismatch vs reference"

    print("KERNEL_OK")
</pallas_src>

<mosaic_0001>
module attributes {stable_mosaic.version = 11 : i64} {
  func.func @resblock_kernel(%arg0: i32, %arg1: i32, %arg2: memref<8x128xf32, #tpu.memory_space<vmem>>, %arg3: memref<128x128xbf16, #tpu.memory_space<vmem>>, %arg4: memref<1x128xf32, #tpu.memory_space<vmem>>, %arg5: memref<128x128xbf16, #tpu.memory_space<vmem>>, %arg6: memref<1x128xf32, #tpu.memory_space<vmem>>, %arg7: memref<8x128xf32, #tpu.memory_space<vmem>>, %arg8: memref<8x128xf32, #tpu.memory_space<vmem>>) attributes {dimension_semantics = [#tpu.dimension_semantics<parallel>, #tpu.dimension_semantics<arbitrary>], iteration_bounds = array<i64: 1, 1>, scalar_prefetch = 0 : i64, scratch_operands = 1 : i64, tpu.core_type = #tpu.core_type<tc>, window_params = [{transform_indices = @transform_0, window_bounds = array<i64: 8, 128>}, {transform_indices = @transform_1, window_bounds = array<i64: 128, 128>}, {transform_indices = @transform_2, window_bounds = array<i64: 1, 128>}, {transform_indices = @transform_3, window_bounds = array<i64: 128, 128>}, {pipeline_mode = #tpu.pipeline_mode<synchronous>, transform_indices = @transform_4, window_bounds = array<i64: 1, 128>}, {transform_indices = @transform_5, window_bounds = array<i64: 8, 128>}]} {
    %c0_i32 = arith.constant 0 : i32
    %0 = arith.cmpi eq, %arg1, %c0_i32 : i32
    %1 = arith.extui %0 : i1 to i32
    %c0_i32_0 = arith.constant 0 : i32
    %2 = arith.cmpi ne, %1, %c0_i32_0 : i32
    scf.if %2 {
      %cst_17 = arith.constant 0.000000e+00 : f32
      %23 = vector.broadcast %cst_17 : f32 to vector<8x128xf32>
      %c0_18 = arith.constant 0 : index
      %c0_19 = arith.constant 0 : index
      %24 = vector.load %arg8[%c0_18, %c0_19] : memref<8x128xf32, #tpu.memory_space<vmem>>, vector<8x128xf32>
      tpu.vector_store %arg8[%c0_18, %c0_19], %23 {strides = array<i32>} : memref<8x128xf32, #tpu.memory_space<vmem>>, vector<8x128xf32>,
    } else {
    }
    %c0 = arith.constant 0 : index
    %c0_1 = arith.constant 0 : index
    %3 = vector.load %arg2[%c0, %c0_1] : memref<8x128xf32, #tpu.memory_space<vmem>>, vector<8x128xf32>
    %cst = arith.constant 0.000000e+00 : f32
    %4 = vector.broadcast %cst : f32 to vector<8x128xf32>
    %5 = arith.maximumf %3, %4 : vector<8x128xf32>
    %6 = arith.truncf %5 : vector<8x128xf32> to vector<8x128xbf16>
    %c0_2 = arith.constant 0 : index
    %c0_3 = arith.constant 0 : index
    %7 = vector.load %arg3[%c0_2, %c0_3] : memref<128x128xbf16, #tpu.memory_space<vmem>>, vector<128x128xbf16>
    %cst_4 = arith.constant dense<0.000000e+00> : vector<8x128xf32>
    %8 = tpu.matmul %6, %7, %cst_4 {dimension_numbers = #tpu.dot_dimension_numbers<[1], [0], [0], [1], [0, 0, 1, 1], [], []>} : vector<8x128xbf16>, vector<128x128xbf16>, vector<8x128xf32> -> vector<8x128xf32>
    %c0_5 = arith.constant 0 : index
    %c0_6 = arith.constant 0 : index
    %9 = vector.load %arg4[%c0_5, %c0_6] : memref<1x128xf32, #tpu.memory_space<vmem>>, vector<1x128xf32>
    %10 = vector.broadcast %9 : vector<1x128xf32> to vector<8x128xf32>
    %11 = arith.addf %8, %10 : vector<8x128xf32>
    %cst_7 = arith.constant 0.000000e+00 : f32
    %12 = vector.broadcast %cst_7 : f32 to vector<8x128xf32>
    %13 = arith.maximumf %11, %12 : vector<8x128xf32>
    %14 = arith.truncf %13 : vector<8x128xf32> to vector<8x128xbf16>
    %c0_8 = arith.constant 0 : index
    %c0_9 = arith.constant 0 : index
    %15 = vector.load %arg8[%c0_8, %c0_9] : memref<8x128xf32, #tpu.memory_space<vmem>>, vector<8x128xf32>
    %c0_10 = arith.constant 0 : index
    %c0_11 = arith.constant 0 : index
    %16 = vector.load %arg5[%c0_10, %c0_11] : memref<128x128xbf16, #tpu.memory_space<vmem>>, vector<128x128xbf16>
    %cst_12 = arith.constant dense<0.000000e+00> : vector<8x128xf32>
    %17 = tpu.matmul %14, %16, %cst_12 {dimension_numbers = #tpu.dot_dimension_numbers<[1], [0], [0], [1], [0, 0, 1, 1], [], []>} : vector<8x128xbf16>, vector<128x128xbf16>, vector<8x128xf32> -> vector<8x128xf32>
    %18 = arith.addf %15, %17 : vector<8x128xf32>
    %c0_13 = arith.constant 0 : index
    %c0_14 = arith.constant 0 : index
    %19 = vector.load %arg8[%c0_13, %c0_14] : memref<8x128xf32, #tpu.memory_space<vmem>>, vector<8x128xf32>
    tpu.vector_store %arg8[%c0_13, %c0_14], %18 {strides = array<i32>} : memref<8x128xf32, #tpu.memory_space<vmem>>, vector<8x128xf32>,
    %c0_i32_15 = arith.constant 0 : i32
    %20 = arith.cmpi eq, %arg1, %c0_i32_15 : i32
    %21 = arith.extui %20 : i1 to i32
    %c0_i32_16 = arith.constant 0 : i32
    %22 = arith.cmpi ne, %21, %c0_i32_16 : i32
    scf.if %22 {
      %c0_17 = arith.constant 0 : index
      %c0_18 = arith.constant 0 : index
      %23 = vector.load %arg8[%c0_17, %c0_18] : memref<8x128xf32, #tpu.memory_space<vmem>>, vector<8x128xf32>
      %c0_19 = arith.constant 0 : index
      %c0_20 = arith.constant 0 : index
      %24 = vector.load %arg6[%c0_19, %c0_20] : memref<1x128xf32, #tpu.memory_space<vmem>>, vector<1x128xf32>
      %25 = vector.broadcast %24 : vector<1x128xf32> to vector<8x128xf32>
      %26 = arith.addf %23, %25 : vector<8x128xf32>
      %c0_21 = arith.constant 0 : index
      %c0_22 = arith.constant 0 : index
      %27 = vector.load %arg2[%c0_21, %c0_22] : memref<8x128xf32, #tpu.memory_space<vmem>>, vector<8x128xf32>
      %28 = arith.addf %26, %27 : vector<8x128xf32>
      %c0_23 = arith.constant 0 : index
      %c0_24 = arith.constant 0 : index
      %29 = vector.load %arg7[%c0_23, %c0_24] : memref<8x128xf32, #tpu.memory_space<vmem>>, vector<8x128xf32>
      tpu.vector_store %arg7[%c0_23, %c0_24], %28 {strides = array<i32>} : memref<8x128xf32, #tpu.memory_space<vmem>>, vector<8x128xf32>,
    } else {
    }
    return
  }
  func.func @transform_0(%arg0: i32, %arg1: i32) -> (i32, i32) {
    %c0_i32 = arith.constant 0 : i32
    %c0_i32_0 = arith.constant 0 : i32
    return %arg0, %c0_i32 : i32, i32
  }
  func.func @transform_1(%arg0: i32, %arg1: i32) -> (i32, i32) {
    %c0_i32 = arith.constant 0 : i32
    %c0_i32_0 = arith.constant 0 : i32
    return %c0_i32, %arg1 : i32, i32
  }
  func.func @transform_2(%arg0: i32, %arg1: i32) -> (i32, i32) {
    %c0_i32 = arith.constant 0 : i32
    %c0_i32_0 = arith.constant 0 : i32
    return %c0_i32, %arg1 : i32, i32
  }
  func.func @transform_3(%arg0: i32, %arg1: i32) -> (i32, i32) {
    %c0_i32 = arith.constant 0 : i32
    %c0_i32_0 = arith.constant 0 : i32
    return %arg1, %c0_i32 : i32, i32
  }
  func.func @transform_4(%arg0: i32, %arg1: i32) -> (i32, i32) {
    %c0_i32 = arith.constant 0 : i32
    %c0_i32_0 = arith.constant 0 : i32
    %c0_i32_1 = arith.constant 0 : i32
    return %c0_i32, %c0_i32_0 : i32, i32
  }
  func.func @transform_5(%arg0: i32, %arg1: i32) -> (i32, i32) {
    %c0_i32 = arith.constant 0 : i32
    %c0_i32_0 = arith.constant 0 : i32
    return %arg0, %c0_i32 : i32, i32
  }
}

</mosaic_0001>

<llo_original>
// kernel: resblock_forward.1
$region0: #{resblock_forward.1}
  #allocation0 [shape = 'u32[]', space=smem, size = 0x4, offset = 0x4, fixed_abs, tag = 'smem constant byte address 0x4 - core index']
  #allocation1 [shape = 'u32[144,128]{1,0:T(1,128)}', space=vmem, size = 0x12000, scoped, tag = 'internal scratch']
  #allocation2 [shape = 'f32[8,128]{1,0:T(8,128)}', space=vmem, size = 0x1000, scoped, tag = 'scratch operand']
  %s0 = inlined_call_operand.vmem [shape: f32[8,128], index: 0, kind: input, shape index: {}]
  %s1 = inlined_call_operand.vmem [shape: bf16[128,128], index: 1, kind: input, shape index: {}]
  %s2 = inlined_call_operand.vmem [shape: f32[1,128], index: 2, kind: input, shape index: {}]
  %s3 = inlined_call_operand.vmem [shape: bf16[128,128], index: 3, kind: input, shape index: {}]
  %s4 = inlined_call_operand.vmem [shape: f32[1,128], index: 4, kind: input, shape index: {}]
  %s5 = inlined_call_operand.vmem [shape: f32[8,128], index: 5, kind: output, shape index: {}]
  %s6 = sld [smem:[#allocation0]]
  $region38: #{resblock_forward.1} parent=0
    _
  %s8 = ssub.s32 1, %s6
  %s9 = scalar_select 0, %s8, %s6
  // Predicated region
  $region2: #{resblock_forward.1} parent=0 // pred_check
    _
  $region3: #{resblock_forward.1} parent=0 // pred_check_branch
    %11 = sbr.rel (0) target = $region5
  $region4: #{resblock_forward.1} parent=0 // pred_region
    _
  $region5: #{resblock_forward.1} parent=0 // pred_fallthru
    _
  // Predicated region
  $region6: #{resblock_forward.1} parent=0 // pred_check
    _
  $region7: #{resblock_forward.1} parent=0 // pred_check_branch
    %13 = sbr.rel (0) target = $region9
  $region8: #{resblock_forward.1} parent=0 // pred_region
    _
  $region9: #{resblock_forward.1} parent=0 // pred_fallthru
    _
  // Predicated region
  $region10: #{resblock_forward.1} parent=0 // pred_check
    _
  $region11: #{resblock_forward.1} parent=0 // pred_check_branch
    %15 = sbr.rel (0) target = $region13
  $region12: #{resblock_forward.1} parent=0 // pred_region
    _
  $region13: #{resblock_forward.1} parent=0 // pred_fallthru
    _
  // Predicated region
  $region14: #{resblock_forward.1} parent=0 // pred_check
    _
  $region15: #{resblock_forward.1} parent=0 // pred_check_branch
    %17 = sbr.rel (0) target = $region17
  $region16: #{resblock_forward.1} parent=0 // pred_region
    _
  $region17: #{resblock_forward.1} parent=0 // pred_fallthru
    _
  // Predicated region
  $region18: #{resblock_forward.1} parent=0 // pred_check
    _
  $region19: #{resblock_forward.1} parent=0 // pred_check_branch
    %19 = sbr.rel (0) target = $region21
  $region20: #{resblock_forward.1} parent=0 // pred_region
    _
  $region21: #{resblock_forward.1} parent=0 // pred_fallthru
    _
  %p21 = scmp.eq.s32.totalorder 0, 0
  // Predicated region
  $region22: #{resblock_forward.1} parent=0 // pred_check
    %p22 = pneg %p21
  $region23: #{resblock_forward.1} parent=0 // pred_check_branch
    %24 = sbr.rel (%p22) target = $region25
  $region24: #{resblock_forward.1} parent=0 // pred_region
    %25 = vst [vmem:[#allocation2] sm:$0xff] 0.0
  $region25: #{resblock_forward.1} parent=0 // pred_fallthru
    _
  %v26 = vld [vmem:[%s0] sm:$0xff]
  %v27 = vmax.f32 %v26, 0.0
  %v28 = vpack.c.bf16 %v27, %v27
  %v29 = vld [vmem:[%s1] sm:$0xf]
  %v30 = vld [vmem:[%s1 + $0x4] sm:$0xf]
  %v31 = vld [vmem:[%s1 + $0x8] sm:$0xf]
  %v32 = vld [vmem:[%s1 + $0xc] sm:$0xf]
  %v33 = vld [vmem:[%s1 + $0x10] sm:$0xf]
  %v34 = vld [vmem:[%s1 + $0x14] sm:$0xf]
  %v35 = vld [vmem:[%s1 + $0x18] sm:$0xf]
  %v36 = vld [vmem:[%s1 + $0x1c] sm:$0xf]
  %v37 = vld [vmem:[%s1 + $0x20] sm:$0xf]
  %v38 = vld [vmem:[%s1 + $0x24] sm:$0xf]
  %v39 = vld [vmem:[%s1 + $0x28] sm:$0xf]
  %v40 = vld [vmem:[%s1 + $0x2c] sm:$0xf]
  %v41 = vld [vmem:[%s1 + $0x30] sm:$0xf]
  %v42 = vld [vmem:[%s1 + $0x34] sm:$0xf]
  %v43 = vld [vmem:[%s1 + $0x38] sm:$0xf]
  %v44 = vld [vmem:[%s1 + $0x3c] sm:$0xf]
  %v45 = vld [vmem:[%s2] sm:$0x1]
  %v47 = vlaneseq
  %v48 = vshrl.u32 %v47, 7
  %v49 = vsub.s32 0, %v48
  %v50 = vrot.slane %v45, %v49
  %v68 = vunpack.c.l.b16 %v29
  %v69 = vunpack.c.l.b16 %v30
  %v70 = vunpack.c.l.b16 %v31
  %v71 = vunpack.c.l.b16 %v32
  %v72 = vunpack.c.l.b16 %v33
  %v73 = vunpack.c.l.b16 %v34
  %v74 = vunpack.c.l.b16 %v35
  %v75 = vunpack.c.l.b16 %v36
  %v76 = vunpack.c.l.b16 %v37
  %v77 = vunpack.c.l.b16 %v38
  %v78 = vunpack.c.l.b16 %v39
  %v79 = vunpack.c.l.b16 %v40
  %v80 = vunpack.c.l.b16 %v41
  %v81 = vunpack.c.l.b16 %v42
  %v82 = vunpack.c.l.b16 %v43
  %v83 = vunpack.c.l.b16 %v44
  %v84 = vpack.c.b16 %v69, %v68
  %v85 = vpack.c.b16 %v71, %v70
  %v86 = vpack.c.b16 %v73, %v72
  %v87 = vpack.c.b16 %v75, %v74
  %v88 = vpack.c.b16 %v77, %v76
  %v89 = vpack.c.b16 %v79, %v78
  %v90 = vpack.c.b16 %v81, %v80
  %v91 = vpack.c.b16 %v83, %v82
  %100 = vmatprep.subr.bf16.mxu0 0
  %101 = vmatpush1.bf16.msra.mxu0 %v91
  %102 = vmatprep.subr.bf16.mxu0 0
  %103 = vmatpush1.bf16.msra.mxu0 %v90
  %104 = vmatprep.subr.bf16.mxu0 0
  %105 = vmatpush1.bf16.msra.mxu0 %v89
  %106 = vmatprep.subr.bf16.mxu0 0
  %107 = vmatpush1.bf16.msra.mxu0 %v88
  %108 = vmatprep.subr.bf16.mxu0 0
  %109 = vmatpush1.bf16.msra.mxu0 %v87
  %110 = vmatprep.subr.bf16.mxu0 0
  %111 = vmatpush1.bf16.msra.mxu0 %v86
  %112 = vmatprep.subr.bf16.mxu0 0
  %113 = vmatpush1.bf16.msra.mxu0 %v85
  %114 = vmatprep.subr.bf16.mxu0 0
  %115 = vmatpush1.bf16.msra.mxu0 %v84
  %116 = vmatprep.subr.bf16.mxu0 0
  %117 = vmatpush2.bf16.msra.mxu0 0
  %118 = vmatprep.subr.bf16.mxu0 0
  %119 = vmatpush2.bf16.msra.mxu0 0
  %120 = vmatprep.subr.bf16.mxu0 0
  %121 = vmatpush2.bf16.msra.mxu0 0
  %122 = vmatprep.subr.bf16.mxu0 0
  %123 = vmatpush2.bf16.msra.mxu0 0
  %124 = vmatprep.subr.bf16.mxu0 0
  %125 = vmatpush2.bf16.msra.mxu0 0
  %126 = vmatprep.subr.bf16.mxu0 0
  %127 = vmatpush2.bf16.msra.mxu0 0
  %128 = vmatprep.subr.bf16.mxu0 0
  %129 = vmatpush2.bf16.msra.mxu0 0
  %130 = vmatprep.subr.bf16.mxu0 0
  %131 = vmatpush2.bf16.msra.mxu0 0
  %132 = vmatprep.mubr.bf16.mxu0 0
  %133 = vmatmul.mubr.bf16.gmra.mxu0 %v28
  %v134 = vpop.f32.mrf.mxu0
  %v135 = vadd.f32 %v50, %v134
  %v136 = vpop.f32.mrf.mxu0
  %v137 = vpop.f32.mrf.mxu0
  %v138 = vpop.f32.mrf.mxu0
  %139 = vdwg.mxu0
  %v140 = vmax.f32 %v135, 0.0
  %v141 = vpack.c.bf16 %v140, %v140
  %v142 = vld [vmem:[#allocation2] sm:$0xff]
  %v143 = vld [vmem:[%s3] sm:$0xf]
  %v144 = vld [vmem:[%s3 + $0x4] sm:$0xf]
  %v145 = vld [vmem:[%s3 + $0x8] sm:$0xf]
  %v146 = vld [vmem:[%s3 + $0xc] sm:$0xf]
  %v147 = vld [vmem:[%s3 + $0x10] sm:$0xf]
  %v148 = vld [vmem:[%s3 + $0x14] sm:$0xf]
  %v149 = vld [vmem:[%s3 + $0x18] sm:$0xf]
  %v150 = vld [vmem:[%s3 + $0x1c] sm:$0xf]
  %v151 = vld [vmem:[%s3 + $0x20] sm:$0xf]
  %v152 = vld [vmem:[%s3 + $0x24] sm:$0xf]
  %v153 = vld [vmem:[%s3 + $0x28] sm:$0xf]
  %v154 = vld [vmem:[%s3 + $0x2c] sm:$0xf]
  %v155 = vld [vmem:[%s3 + $0x30] sm:$0xf]
  %v156 = vld [vmem:[%s3 + $0x34] sm:$0xf]
  %v157 = vld [vmem:[%s3 + $0x38] sm:$0xf]
  %v158 = vld [vmem:[%s3 + $0x3c] sm:$0xf]
  %v175 = vunpack.c.l.b16 %v143
  %v176 = vunpack.c.l.b16 %v144
  %v177 = vunpack.c.l.b16 %v145
  %v178 = vunpack.c.l.b16 %v146
  %v179 = vunpack.c.l.b16 %v147
  %v180 = vunpack.c.l.b16 %v148
  %v181 = vunpack.c.l.b16 %v149
  %v182 = vunpack.c.l.b16 %v150
  %v183 = vunpack.c.l.b16 %v151
  %v184 = vunpack.c.l.b16 %v152
  %v185 = vunpack.c.l.b16 %v153
  %v186 = vunpack.c.l.b16 %v154
  %v187 = vunpack.c.l.b16 %v155
  %v188 = vunpack.c.l.b16 %v156
  %v189 = vunpack.c.l.b16 %v157
  %v190 = vunpack.c.l.b16 %v158
  %v191 = vpack.c.b16 %v176, %v175
  %v192 = vpack.c.b16 %v178, %v177
  %v193 = vpack.c.b16 %v180, %v179
  %v194 = vpack.c.b16 %v182, %v181
  %v195 = vpack.c.b16 %v184, %v183
  %v196 = vpack.c.b16 %v186, %v185
  %v197 = vpack.c.b16 %v188, %v187
  %v198 = vpack.c.b16 %v190, %v189
  %207 = vmatprep.subr.bf16.mxu0 0
  %208 = vmatpush1.bf16.msra.mxu0 %v198
  %209 = vmatprep.subr.bf16.mxu0 0
  %210 = vmatpush1.bf16.msra.mxu0 %v197
  %211 = vmatprep.subr.bf16.mxu0 0
  %212 = vmatpush1.bf16.msra.mxu0 %v196
  %213 = vmatprep.subr.bf16.mxu0 0
  %214 = vmatpush1.bf16.msra.mxu0 %v195
  %215 = vmatprep.subr.bf16.mxu0 0
  %216 = vmatpush1.bf16.msra.mxu0 %v194
  %217 = vmatprep.subr.bf16.mxu0 0
  %218 = vmatpush1.bf16.msra.mxu0 %v193
  %219 = vmatprep.subr.bf16.mxu0 0
  %220 = vmatpush1.bf16.msra.mxu0 %v192
  %221 = vmatprep.subr.bf16.mxu0 0
  %222 = vmatpush1.bf16.msra.mxu0 %v191
  %223 = vmatprep.subr.bf16.mxu0 0
  %224 = vmatpush2.bf16.msra.mxu0 0
  %225 = vmatprep.subr.bf16.mxu0 0
  %226 = vmatpush2.bf16.msra.mxu0 0
  %227 = vmatprep.subr.bf16.mxu0 0
  %228 = vmatpush2.bf16.msra.mxu0 0
  %229 = vmatprep.subr.bf16.mxu0 0
  %230 = vmatpush2.bf16.msra.mxu0 0
  %231 = vmatprep.subr.bf16.mxu0 0
  %232 = vmatpush2.bf16.msra.mxu0 0
  %233 = vmatprep.subr.bf16.mxu0 0
  %234 = vmatpush2.bf16.msra.mxu0 0
  %235 = vmatprep.subr.bf16.mxu0 0
  %236 = vmatpush2.bf16.msra.mxu0 0
  %237 = vmatprep.subr.bf16.mxu0 0
  %238 = vmatpush2.bf16.msra.mxu0 0
  %239 = vmatprep.mubr.bf16.mxu0 0
  %240 = vmatmul.mubr.bf16.gmra.mxu0 %v141
  %v241 = vpop.f32.mrf.mxu0
  %v242 = vadd.f32 0.0, %v241
  %v243 = vpop.f32.mrf.mxu0
  %v244 = vpop.f32.mrf.mxu0
  %v245 = vpop.f32.mrf.mxu0
  %246 = vdwg.mxu0
  %v247 = vadd.f32 %v142, %v242
  %248 = vst [vmem:[#allocation2] sm:$0xff] %v247
  // Predicated region
  $region26: #{resblock_forward.1} parent=0 // pred_check
    %p249 = pneg %p21
  $region27: #{resblock_forward.1} parent=0 // pred_check_branch
    %251 = sbr.rel (%p249) target = $region29
  $region28: #{resblock_forward.1} parent=0 // pred_region
    %v252 = vld [vmem:[#allocation2] sm:$0xff]
    %v253 = vld [vmem:[%s4] sm:$0x1]
    %v255 = vlaneseq
    %v256 = vshrl.u32 %v255, 7
    %v257 = vsub.s32 0, %v256
    %v258 = vrot.slane %v253, %v257
    %v260 = vadd.f32 %v252, %v258
    %v261 = vld [vmem:[%s0] sm:$0xff]
    %v262 = vadd.f32 %v260, %v261
    %263 = vst [vmem:[%s5] sm:$0xff] %v262
  $region29: #{resblock_forward.1} parent=0 // pred_fallthru
    _
  // Predicated region
  $region30: #{resblock_forward.1} parent=0 // pred_check
    _
  $region31: #{resblock_forward.1} parent=0 // pred_check_branch
    %265 = sbr.rel (0) target = $region33
  $region32: #{resblock_forward.1} parent=0 // pred_region
    _
  $region33: #{resblock_forward.1} parent=0 // pred_fallthru
    _
  // Predicated region
  $region34: #{resblock_forward.1} parent=0 // pred_check
    _
  $region35: #{resblock_forward.1} parent=0 // pred_check_branch
    %267 = sbr.rel (0) target = $region37
  $region36: #{resblock_forward.1} parent=0 // pred_region
    _
  $region37: #{resblock_forward.1} parent=0 // pred_fallthru
    _

</llo_original>
